<compile_context>
chip_gen: v7x
topology: tpu7x:2x2x1
jax: 0.10.0
libtpu: 0.0.40
codegen_flags: <defaults>
</compile_context>

<pallas_src>
import functools

import jax
import jax.numpy as jnp
from jax import lax
from jax.experimental import pallas as pl
from jax.experimental.pallas import tpu as pltpu


def _make_siglip_kernel(n, n_pad, tile, sub):
    """Builds a kernel specialized on static sizes (masking only if padded)."""
    nc = tile // sub
    needs_mask = n_pad != n

    def kernel(scale_ref, bias_ref, img_ref, txt_ref, out_ref):
        i = pl.program_id(0)          # row block
        j = pl.program_id(1)          # col block (reduction axis)

        scale = scale_ref[0, 0]
        bias = bias_ref[0, 0]

        @pl.when(j == 0)
        def _init():
            out_ref[...] = jnp.zeros_like(out_ref)

        img = img_ref[...]            # (tile, D), native dtype (bf16/f32)

        def chunk_body(c, acc):
            c0 = pl.multiple_of(c * sub, sub)
            txt_c = txt_ref[pl.ds(c0, sub), :]            # (sub, D)
            # Contract over D directly (no transpose / XLU relayout), f32 acc.
            logits = lax.dot_general(
                img, txt_c,
                dimension_numbers=(((1,), (1,)), ((), ())),
                preferred_element_type=jnp.float32)       # (tile, sub) f32
            logits = logits * scale + bias
            # logsigmoid(-logits), numerically stable:
            #   = -max(logits, 0) - log1p(exp(-|logits|))
            contrib = (-jnp.maximum(logits, 0.0)
                       - jnp.log1p(jnp.exp(-jnp.abs(logits))))
            if needs_mask:
                grow = i * tile + lax.broadcasted_iota(jnp.int32, (tile, sub), 0)
                gcol = (j * tile + c0
                        + lax.broadcasted_iota(jnp.int32, (tile, sub), 1))
                contrib = jnp.where((grow < n) & (gcol < n), contrib, 0.0)
            # Lane-axis reduce first: (tile, 1) row partials.
            return acc + jnp.sum(contrib, axis=-1, keepdims=True)

        part = lax.fori_loop(0, nc, chunk_body,
                             jnp.zeros((tile, 1), jnp.float32), unroll=True)
        out_ref[...] += part

        # Diagonal (+1 label) correction, only on diagonal tiles:
        #   logsigmoid(+z) = logsigmoid(-z) + z
        # so add the diagonal logits, recomputed as a row-wise dot in f32.
        @pl.when(i == j)
        def _diag():
            d = jnp.sum(img.astype(jnp.float32) * txt_ref[...].astype(jnp.float32),
                        axis=-1, keepdims=True)           # (tile, 1)
            dvals = d * scale + bias
            if needs_mask:
                gr = i * tile + lax.broadcasted_iota(jnp.int32, (tile, 1), 0)
                dvals = jnp.where(gr < n, dvals, 0.0)
            out_ref[...] += dvals

    return kernel


@functools.partial(jax.jit, static_argnames=("tile", "sub"))
def siglip_loss(image_features, text_features, logit_scale, logit_bias,
                *, tile=128, sub=128):
    """Pallas-backed SigLIP loss (world_size == 1 forward pass).

    image_features, text_features: (N, D), f32 or bf16 (bf16 recommended:
      halves HBM->VMEM DMA bytes and runs the MXU at bf16 rate; accumulation
      stays f32). D a multiple of 128 uses the MXU most efficiently.
    logit_scale, logit_bias: scalars.
    Returns scalar f32 loss.
    """
    n, d = image_features.shape
    assert text_features.shape == (n, d)
    assert tile % 8 == 0 and sub % 128 == 0 and tile % sub == 0

    # Pad batch to a multiple of the tile; the kernel masks padded rows/cols.
    n_pad = ((n + tile - 1) // tile) * tile
    if n_pad != n:
        pad = n_pad - n
        image_features = jnp.pad(image_features, ((0, pad), (0, 0)))
        text_features = jnp.pad(text_features, ((0, pad), (0, 0)))

    scale = jnp.asarray(logit_scale, jnp.float32).reshape(1, 1)
    bias = jnp.asarray(logit_bias, jnp.float32).reshape(1, 1)

    gi = n_pad // tile
    row_sums = pl.pallas_call(
        _make_siglip_kernel(n, n_pad, tile, sub),
        out_shape=jax.ShapeDtypeStruct((n_pad, 1), jnp.float32),
        grid=(gi, gi),
        in_specs=[
            pl.BlockSpec((1, 1), lambda i, j: (0, 0),
                         memory_space=pltpu.SMEM),        # logit_scale
            pl.BlockSpec((1, 1), lambda i, j: (0, 0),
                         memory_space=pltpu.SMEM),        # logit_bias
            pl.BlockSpec((tile, d), lambda i, j: (i, 0)),  # image_features
            pl.BlockSpec((tile, d), lambda i, j: (j, 0)),  # text_features
        ],
        out_specs=pl.BlockSpec((tile, 1), lambda i, j: (i, 0)),
        compiler_params=pltpu.CompilerParams(
            dimension_semantics=("parallel", "arbitrary"),
            vmem_limit_bytes=32 * 1024 * 1024),
    )(scale, bias, image_features, text_features)

    # Final tiny reduction + normalization in the wrapper.
    return -jnp.sum(row_sums) / jnp.float32(n)


def siglip_loss_ref(image_features, text_features, logit_scale, logit_bias):
    """Pure-JAX reference mirroring the PyTorch module (f32 math)."""
    n = image_features.shape[0]
    img = image_features.astype(jnp.float32)
    txt = text_features.astype(jnp.float32)
    logits = logit_scale * img @ txt.T + logit_bias
    labels = 2.0 * jnp.eye(n, dtype=jnp.float32) - 1.0
    return -jnp.sum(jax.nn.log_sigmoid(labels * logits)) / n


if __name__ == "__main__":
    key = jax.random.PRNGKey(0)
    k1, k2, k3, k4 = jax.random.split(key, 4)

    def _norm(x):
        return x / jnp.linalg.norm(x, axis=-1, keepdims=True)

    # SigLIP-style init: scale = exp(log(10)), bias = -10.
    logit_scale = jnp.float32(10.0)
    logit_bias = jnp.float32(-10.0)

    D = 128

    # Case 1: tile-divisible batch, f32 features (grid 3x3, diag + off-diag tiles).
    N1 = 384
    img1 = _norm(jax.random.normal(k1, (N1, D), jnp.float32))
    txt1 = _norm(jax.random.normal(k2, (N1, D), jnp.float32))
    loss1 = jax.block_until_ready(siglip_loss(img1, txt1, logit_scale, logit_bias))
    ref1 = siglip_loss_ref(img1, txt1, logit_scale, logit_bias)
    assert jnp.allclose(loss1, ref1, rtol=1e-4, atol=1e-4), (loss1, ref1)

    # Case 2: non-divisible batch -> exercises padding + masking path.
    N2 = 300
    img2 = _norm(jax.random.normal(k3, (N2, D), jnp.float32))
    txt2 = _norm(jax.random.normal(k4, (N2, D), jnp.float32))
    loss2 = jax.block_until_ready(siglip_loss(img2, txt2, logit_scale, logit_bias))
    ref2 = siglip_loss_ref(img2, txt2, logit_scale, logit_bias)
    assert jnp.allclose(loss2, ref2, rtol=1e-4, atol=1e-4), (loss2, ref2)

    # Case 3: bf16 features straight into the kernel (MXU bf16 path, f32 acc).
    img3 = img1.astype(jnp.bfloat16)
    txt3 = txt1.astype(jnp.bfloat16)
    loss3 = jax.block_until_ready(siglip_loss(img3, txt3, logit_scale, logit_bias))
    ref3 = siglip_loss_ref(img3, txt3, logit_scale, logit_bias)
    assert jnp.allclose(loss3, ref3, rtol=2e-3, atol=2e-3), (loss3, ref3)

    print("KERNEL_OK")
</pallas_src>

<mosaic_0001>
module attributes {stable_mosaic.version = 11 : i64} {
  func.func @kernel(%arg0: i32, %arg1: i32, %arg2: memref<1x1xf32, #tpu.memory_space<smem>>, %arg3: memref<1x1xf32, #tpu.memory_space<smem>>, %arg4: memref<128x128xf32, #tpu.memory_space<vmem>>, %arg5: memref<128x128xf32, #tpu.memory_space<vmem>>, %arg6: memref<128x1xf32, #tpu.memory_space<vmem>>) attributes {dimension_semantics = [#tpu.dimension_semantics<parallel>, #tpu.dimension_semantics<arbitrary>], iteration_bounds = array<i64: 3, 3>, scalar_prefetch = 0 : i64, scratch_operands = 0 : i64, tpu.core_type = #tpu.core_type<tc>, window_params = [{transform_indices = @transform_0, window_bounds = array<i64: 1, 1>}, {transform_indices = @transform_1, window_bounds = array<i64: 1, 1>}, {transform_indices = @transform_2, window_bounds = array<i64: 128, 128>}, {transform_indices = @transform_3, window_bounds = array<i64: 128, 128>}, {transform_indices = @transform_4, window_bounds = array<i64: 128, 1>}]} {
    %c0 = arith.constant 0 : index
    %c0_0 = arith.constant 0 : index
    %0 = memref.load %arg2[%c0, %c0_0] : memref<1x1xf32, #tpu.memory_space<smem>>
    %c0_1 = arith.constant 0 : index
    %c0_2 = arith.constant 0 : index
    %1 = memref.load %arg3[%c0_1, %c0_2] : memref<1x1xf32, #tpu.memory_space<smem>>
    %c0_i32 = arith.constant 0 : i32
    %2 = arith.cmpi eq, %arg1, %c0_i32 : i32
    %3 = arith.extui %2 : i1 to i32
    %c0_i32_3 = arith.constant 0 : i32
    %4 = arith.cmpi ne, %3, %c0_i32_3 : i32
    scf.if %4 {
      %cst_18 = arith.constant 0.000000e+00 : f32
      %35 = vector.broadcast %cst_18 : f32 to vector<128x1xf32>
      %c0_19 = arith.constant 0 : index
      %c0_20 = arith.constant 0 : index
      %36 = vector.load %arg6[%c0_19, %c0_20] : memref<128x1xf32, #tpu.memory_space<vmem>>, vector<128x1xf32>
      tpu.vector_store %arg6[%c0_19, %c0_20], %35 {strides = array<i32>} : memref<128x1xf32, #tpu.memory_space<vmem>>, vector<128x1xf32>,
    } else {
    }
    %c0_4 = arith.constant 0 : index
    %c0_5 = arith.constant 0 : index
    %5 = vector.load %arg4[%c0_4, %c0_5] : memref<128x128xf32, #tpu.memory_space<vmem>>, vector<128x128xf32>
    %cst = arith.constant 0.000000e+00 : f32
    %6 = vector.broadcast %cst : f32 to vector<128x1xf32>
    %c0_i32_6 = arith.constant 0 : i32
    %c128_i32 = arith.constant 128 : i32
    %7 = arith.muli %c0_i32_6, %c128_i32 : i32
    %8 = tpu.assume_multiple %7, 128 : i32
    %9 = arith.index_cast %8 : i32 to index
    %c0_7 = arith.constant 0 : index
    %10 = vector.load %arg5[%9, %c0_7] : memref<128x128xf32, #tpu.memory_space<vmem>>, vector<128x128xf32>
    %cst_8 = arith.constant dense<0.000000e+00> : vector<128x128xf32>
    %11 = tpu.matmul %5, %10, %cst_8 {dimension_numbers = #tpu.dot_dimension_numbers<[1], [1], [0], [0], [0, 0, 1, 0], [], []>} : vector<128x128xf32>, vector<128x128xf32>, vector<128x128xf32> -> vector<128x128xf32>
    %12 = vector.broadcast %0 : f32 to vector<128x128xf32>
    %13 = arith.mulf %11, %12 : vector<128x128xf32>
    %14 = vector.broadcast %1 : f32 to vector<128x128xf32>
    %15 = arith.addf %13, %14 : vector<128x128xf32>
    %cst_9 = arith.constant 0.000000e+00 : f32
    %16 = vector.broadcast %cst_9 : f32 to vector<128x128xf32>
    %17 = arith.maximumf %15, %16 : vector<128x128xf32>
    %cst_10 = arith.constant 0.000000e+00 : f32
    %18 = vector.broadcast %cst_10 : f32 to vector<128x128xf32>
    %19 = arith.subf %18, %17 : vector<128x128xf32>
    %20 = math.absf %15 : vector<128x128xf32>
    %cst_11 = arith.constant 0.000000e+00 : f32
    %21 = vector.broadcast %cst_11 : f32 to vector<128x128xf32>
    %22 = arith.subf %21, %20 : vector<128x128xf32>
    %23 = math.exp %22 : vector<128x128xf32>
    %24 = math.log1p %23 : vector<128x128xf32>
    %25 = arith.subf %19, %24 : vector<128x128xf32>
    %cst_12 = arith.constant dense<0.000000e+00> : vector<128xf32>
    %26 = vector.multi_reduction <add>, %25, %cst_12 [1] : vector<128x128xf32> to vector<128xf32>
    %27 = vector.shape_cast %26 : vector<128xf32> to vector<128x1xf32>
    %28 = arith.addf %6, %27 : vector<128x1xf32>
    %c1_i32 = arith.constant 1 : i32
    %c0_13 = arith.constant 0 : index
    %c0_14 = arith.constant 0 : index
    %29 = vector.load %arg6[%c0_13, %c0_14] : memref<128x1xf32, #tpu.memory_space<vmem>>, vector<128x1xf32>
    %30 = arith.addf %29, %28 : vector<128x1xf32>
    %c0_15 = arith.constant 0 : index
    %c0_16 = arith.constant 0 : index
    %31 = vector.load %arg6[%c0_15, %c0_16] : memref<128x1xf32, #tpu.memory_space<vmem>>, vector<128x1xf32>
    tpu.vector_store %arg6[%c0_15, %c0_16], %30 {strides = array<i32>} : memref<128x1xf32, #tpu.memory_space<vmem>>, vector<128x1xf32>,
    %32 = arith.cmpi eq, %arg0, %arg1 : i32
    %33 = arith.extui %32 : i1 to i32
    %c0_i32_17 = arith.constant 0 : i32
    %34 = arith.cmpi ne, %33, %c0_i32_17 : i32
    scf.if %34 {
      %c0_18 = arith.constant 0 : index
      %c0_19 = arith.constant 0 : index
      %35 = vector.load %arg5[%c0_18, %c0_19] : memref<128x128xf32, #tpu.memory_space<vmem>>, vector<128x128xf32>
      %36 = arith.mulf %5, %35 : vector<128x128xf32>
      %cst_20 = arith.constant dense<0.000000e+00> : vector<128xf32>
      %37 = vector.multi_reduction <add>, %36, %cst_20 [1] : vector<128x128xf32> to vector<128xf32>
      %38 = vector.shape_cast %37 : vector<128xf32> to vector<128x1xf32>
      %39 = vector.broadcast %0 : f32 to vector<128x1xf32>
      %40 = arith.mulf %38, %39 : vector<128x1xf32>
      %41 = vector.broadcast %1 : f32 to vector<128x1xf32>
      %42 = arith.addf %40, %41 : vector<128x1xf32>
      %c0_21 = arith.constant 0 : index
      %c0_22 = arith.constant 0 : index
      %43 = vector.load %arg6[%c0_21, %c0_22] : memref<128x1xf32, #tpu.memory_space<vmem>>, vector<128x1xf32>
      %44 = arith.addf %43, %42 : vector<128x1xf32>
      %c0_23 = arith.constant 0 : index
      %c0_24 = arith.constant 0 : index
      %45 = vector.load %arg6[%c0_23, %c0_24] : memref<128x1xf32, #tpu.memory_space<vmem>>, vector<128x1xf32>
      tpu.vector_store %arg6[%c0_23, %c0_24], %44 {strides = array<i32>} : memref<128x1xf32, #tpu.memory_space<vmem>>, vector<128x1xf32>,
    } else {
    }
    return
  }
  func.func @transform_0(%arg0: i32, %arg1: i32) -> (i32, i32) {
    %c0_i32 = arith.constant 0 : i32
    %c0_i32_0 = arith.constant 0 : i32
    %c0_i32_1 = arith.constant 0 : i32
    return %c0_i32, %c0_i32_0 : i32, i32
  }
  func.func @transform_1(%arg0: i32, %arg1: i32) -> (i32, i32) {
    %c0_i32 = arith.constant 0 : i32
    %c0_i32_0 = arith.constant 0 : i32
    %c0_i32_1 = arith.constant 0 : i32
    return %c0_i32, %c0_i32_0 : i32, i32
  }
  func.func @transform_2(%arg0: i32, %arg1: i32) -> (i32, i32) {
    %c0_i32 = arith.constant 0 : i32
    %c0_i32_0 = arith.constant 0 : i32
    return %arg0, %c0_i32 : i32, i32
  }
  func.func @transform_3(%arg0: i32, %arg1: i32) -> (i32, i32) {
    %c0_i32 = arith.constant 0 : i32
    %c0_i32_0 = arith.constant 0 : i32
    return %arg1, %c0_i32 : i32, i32
  }
  func.func @transform_4(%arg0: i32, %arg1: i32) -> (i32, i32) {
    %c0_i32 = arith.constant 0 : i32
    %c0_i32_0 = arith.constant 0 : i32
    return %arg0, %c0_i32 : i32, i32
  }
}

</mosaic_0001>

<llo_original>
// kernel: siglip_loss.1
$region0: #{siglip_loss.1}
  #allocation0 [shape = 'u32[]', space=smem, size = 0x4, offset = 0x4, fixed_abs, tag = 'smem constant byte address 0x4 - core index']
  #allocation1 [shape = 'u32[144,128]{1,0:T(1,128)}', space=vmem, size = 0x12000, scoped, tag = 'internal scratch']
  #allocation2 [shape = 'f32[1,1]{1,0:T(1,128)S(6)}', space=smem, size = 0x200, scoped, tag = 'scoped memory for siglip_loss.1']
  #allocation3 [shape = 'f32[1,1]{1,0:T(1,128)S(6)}', space=smem, size = 0x200, scoped, tag = 'scoped memory for siglip_loss.1']
  %s0 = inlined_call_operand.<no memory space> [shape: f32[1,1], index: 0, kind: input, shape index: {}]
  %s1 = inlined_call_operand.<no memory space> [shape: f32[1,1], index: 1, kind: input, shape index: {}]
  %s2 = inlined_call_operand.hbm [shape: f32[384,128], index: 2, kind: input, shape index: {}]
  %s3 = inlined_call_operand.hbm [shape: f32[384,128], index: 3, kind: input, shape index: {}]
  %s4 = inlined_call_operand.vmem [shape: f32[384,1], index: 4, kind: output, shape index: {}]
  %s5 = sld [smem:[#allocation0]]
  $region65: #{siglip_loss.1} parent=0
    _
  %s7 = ssub.s32 1, %s5
  %s8 = scalar_select 0, %s7, %s5
  %9 = sst [smem:[#allocation2]] %s0
  %10 = sst [smem:[#allocation3]] %s1
  $region1: #{siglip_loss.1} parent=0
    #allocation4 [shape = 'u8[131072]{0}', space=vmem, size = 0x20000, scoped, tag = 'input window, operand 2']
    #allocation5 [shape = 's32[2]{0}', space=sflag, size = 0x8, scoped, tag = 'scoped memory for siglip_loss.1']
    #allocation6 [shape = 'u8[131072]{0}', space=vmem, size = 0x20000, scoped, tag = 'input window, operand 3']
    #allocation7 [shape = 's32[2]{0}', space=sflag, size = 0x8, scoped, tag = 'scoped memory for siglip_loss.1']
    %11 = vsyncpa [#allocation5], 0
    %s12 = scalar_lea.sflag [#allocation5], 1
    %13 = vsyncpa %s12, 0
    %14 = vsyncpa [#allocation7], 0
    %s15 = scalar_lea.sflag [#allocation7], 1
    %16 = vsyncpa %s15, 0
    loop: start=0, step=1, limit=11
    $region2: #{siglip_loss.1} parent=1 // loop_pre_header
      _
    $region3: #{siglip_loss.1} parent=1 // loop_header
      %s18 = sphi 0, %s22
      %p19 = scmp.ge.s32.totalorder %s18, 11
      %s25 = sphi 0, %s37
      %s26 = sphi 0, %s33
      %s27 = sphi 0, %s25
      %s28 = sphi 0, %s26
      %s29 = sphi 0, %s27
      %s30 = sphi 0, %s28
      %s38 = sphi 0, %s38
      %s40 = sphi 0, %s38
      %s41 = sphi 0, %s40
      %s55 = sphi 0, %s41
      %s59 = sphi 0, %s59
      %s61 = sphi 0, %s59
      %s62 = sphi 0, %s61
      %s76 = sphi 0, %s62
      %s82 = sphi 0, %s84
      %s85 = sphi 0, %s82
      %s86 = sphi 0, %s85
      %s102 = sphi 0, %s86
      %s108 = sphi 0, %s110
      %s111 = sphi 0, %s108
      %s112 = sphi 0, %s111
      %s128 = sphi 0, %s112
      %s134 = sphi 0, %s136
      %s137 = sphi 0, %s134
      %s138 = sphi 0, %s137
      %s154 = sphi 0, %s138
    $region4: #{siglip_loss.1} parent=1 // loop_header_branch
      %21 = sbr.rel (%p19) target = $region8
    $region5: #{siglip_loss.1} parent=1 // loop_body
      %s23 = ssub.s32 %s18, 1
      %s24 = ssub.s32 %s18, 2
      %s31 = sadd.s32 1, %s26
      %p32 = scmp.ge.s32.totalorder %s31, 3
      %s33 = scalar_select %p32, 0, %s31
      %s34 = sadd.s32 1, %s25
      %s35 = scalar_select %p32, %s34, %s25
      %p36 = scmp.ge.s32.totalorder %s35, 3
      %s37 = scalar_select %p36, 0, %s35
      %s39 = sadd.s32 %s38, 1
      %p42 = scmp.eq.s32.totalorder %s18, 8
      %p43 = scmp.ne.s32.totalorder %s38, %s40
      %p44 = scmp.eq.s32.totalorder %s18, 0
      %p45 = por %p43, %p44
      %p46 = scmp.ne.s32.totalorder %s38, %s40
      %p47 = scmp.eq.s32.totalorder %s23, 8
      %p48 = por %p46, %p47
      %p49 = scmp.ne.s32.totalorder %s40, %s41
      %p50 = scmp.eq.s32.totalorder %s23, 0
      %p51 = por %p49, %p50
      %p52 = scmp.ne.s32.totalorder %s40, %s41
      %p53 = scmp.eq.s32.totalorder %s24, 8
      %p54 = por %p52, %p53
      %p56 = scmp.ne.s32.totalorder %s41, %s55
      %p57 = scmp.eq.s32.totalorder %s24, 0
      %p58 = por %p56, %p57
      %s60 = sadd.s32 %s59, 1
      %p63 = scmp.eq.s32.totalorder %s18, 8
      %p64 = scmp.ne.s32.totalorder %s59, %s61
      %p65 = scmp.eq.s32.totalorder %s18, 0
      %p66 = por %p64, %p65
      %p67 = scmp.ne.s32.totalorder %s59, %s61
      %p68 = scmp.eq.s32.totalorder %s23, 8
      %p69 = por %p67, %p68
      %p70 = scmp.ne.s32.totalorder %s61, %s62
      %p71 = scmp.eq.s32.totalorder %s23, 0
      %p72 = por %p70, %p71
      %p73 = scmp.ne.s32.totalorder %s61, %s62
      %p74 = scmp.eq.s32.totalorder %s24, 8
      %p75 = por %p73, %p74
      %p77 = scmp.ne.s32.totalorder %s62, %s76
      %p78 = scmp.eq.s32.totalorder %s24, 0
      %p79 = por %p77, %p78
      %s80 = ssub.s32 %s25, %s37
      %p81 = scmp.eq.s32.totalorder %s80, 0
      %s83 = sadd.s32 %s82, 1
      %s84 = scalar_select %p81, %s82, %s83
      %p87 = pneg %p81
      %p88 = scmp.eq.s32.totalorder %s18, 8
      %p89 = por %p87, %p88
      %p90 = scmp.ne.s32.totalorder %s82, %s85
      %p91 = scmp.eq.s32.totalorder %s18, 0
      %p92 = por %p90, %p91
      %p93 = scmp.ne.s32.totalorder %s82, %s85
      %p94 = scmp.eq.s32.totalorder %s23, 8
      %p95 = por %p93, %p94
      %p96 = scmp.ne.s32.totalorder %s85, %s86
      %p97 = scmp.eq.s32.totalorder %s23, 0
      %p98 = por %p96, %p97
      %p99 = scmp.ne.s32.totalorder %s85, %s86
      %p100 = scmp.eq.s32.totalorder %s24, 8
      %p101 = por %p99, %p100
      %p103 = scmp.ne.s32.totalorder %s86, %s102
      %p104 = scmp.eq.s32.totalorder %s24, 0
      %p105 = por %p103, %p104
      %s106 = ssub.s32 %s26, %s33
      %p107 = scmp.eq.s32.totalorder %s106, 0
      %s109 = sadd.s32 %s108, 1
      %s110 = scalar_select %p107, %s108, %s109
      %p113 = pneg %p107
      %p114 = scmp.eq.s32.totalorder %s18, 8
      %p115 = por %p113, %p114
      %p116 = scmp.ne.s32.totalorder %s108, %s111
      %p117 = scmp.eq.s32.totalorder %s18, 0
      %p118 = por %p116, %p117
      %p119 = scmp.ne.s32.totalorder %s108, %s111
      %p120 = scmp.eq.s32.totalorder %s23, 8
      %p121 = por %p119, %p120
      %p122 = scmp.ne.s32.totalorder %s111, %s112
      %p123 = scmp.eq.s32.totalorder %s23, 0
      %p124 = por %p122, %p123
      %p125 = scmp.ne.s32.totalorder %s111, %s112
      %p126 = scmp.eq.s32.totalorder %s24, 8
      %p127 = por %p125, %p126
      %p129 = scmp.ne.s32.totalorder %s112, %s128
      %p130 = scmp.eq.s32.totalorder %s24, 0
      %p131 = por %p129, %p130
      %s132 = ssub.s32 %s25, %s37
      %p133 = scmp.eq.s32.totalorder %s132, 0
      %s135 = sadd.s32 %s134, 1
      %s136 = scalar_select %p133, %s134, %s135
      %p139 = pneg %p133
      %p140 = scmp.eq.s32.totalorder %s18, 8
      %p141 = por %p139, %p140
      %p142 = scmp.ne.s32.totalorder %s134, %s137
      %p143 = scmp.eq.s32.totalorder %s18, 0
      %p144 = por %p142, %p143
      %p145 = scmp.ne.s32.totalorder %s134, %s137
      %p146 = scmp.eq.s32.totalorder %s23, 8
      %p147 = por %p145, %p146
      %p148 = scmp.ne.s32.totalorder %s137, %s138
      %p149 = scmp.eq.s32.totalorder %s23, 0
      %p150 = por %p148, %p149
      %p151 = scmp.ne.s32.totalorder %s137, %s138
      %p152 = scmp.eq.s32.totalorder %s24, 8
      %p153 = por %p151, %p152
      %p155 = scmp.ne.s32.totalorder %s138, %s154
      %p156 = scmp.eq.s32.totalorder %s24, 0
      %p157 = por %p155, %p156
      %p158 = scmp.le.s32.totalorder 1, %s18
      %p159 = scmp.lt.s32.totalorder %s18, 10
      %p160 = pnand %p158, %p159
      %p161 = pneg %p160
      // Predicated region
      $region9: #{siglip_loss.1} parent=5 // pred_check
        _
      $region10: #{siglip_loss.1} parent=5 // pred_check_branch
        %163 = sbr.rel (%p160) target = $region12
      $region11: #{siglip_loss.1} parent=5 // pred_region
        %s164 = ssub.s32 %s18, 1
        // Predicated region
        $region13: #{siglip_loss.1} parent=11 // pred_check
          %p165 = pneg %p51
        $region14: #{siglip_loss.1} parent=11 // pred_check_branch
          %167 = sbr.rel (%p165) target = $region16
        $region15: #{siglip_loss.1} parent=11 // pred_region
          _
        $region16: #{siglip_loss.1} parent=11 // pred_fallthru
          _
        // Predicated region
        $region17: #{siglip_loss.1} parent=11 // pred_check
          %p168 = pneg %p72
        $region18: #{siglip_loss.1} parent=11 // pred_check_branch
          %170 = sbr.rel (%p168) target = $region20
        $region19: #{siglip_loss.1} parent=11 // pred_region
          _
        $region20: #{siglip_loss.1} parent=11 // pred_fallthru
          _
      $region12: #{siglip_loss.1} parent=5 // pred_fallthru
        _
      %p171 = scmp.lt.s32.totalorder %s18, 9
      // Predicated region
      $region21: #{siglip_loss.1} parent=5 // pred_check
        %p172 = pneg %p171
      $region22: #{siglip_loss.1} parent=5 // pred_check_branch
        %174 = sbr.rel (%p172) target = $region24
      $region23: #{siglip_loss.1} parent=5 // pred_region
        // Predicated region
        $region25: #{siglip_loss.1} parent=23 // pred_check
          %p175 = pneg %p92
        $region26: #{siglip_loss.1} parent=23 // pred_check_branch
          %177 = sbr.rel (%p175) target = $region28
        $region27: #{siglip_loss.1} parent=23 // pred_region
          %s178 = sand.u32 %s82, 1
          %s179 = scalar_lea.sflag [#allocation5], %s178
          %s180 = sand.u32 %s82, 1
          %s181 = smul.addr %s180, 128
          %s182 = scalar_lea.vmem [#allocation4], %s181
          %s183 = smul.u32 16, %s25
          %s185 = ssub.s32 2048, 2048
          %186 = vsyncadd %s179, %s185
          %s187 = smul.addr %s183, 128
          %s188 = scalar_lea.hbm %s2, %s187
          %s189 = sshll.u32 %s182, 4
          %s190 = int_to_ptr.vmem [resolvable:$true] %s189
          %195 = dma.hbm_to_vmem [thread:$0]  %s188, 2048, %s190, %s179, 128, 128, 8
        $region28: #{siglip_loss.1} parent=23 // pred_fallthru
          _
        // Predicated region
        $region29: #{siglip_loss.1} parent=23 // pred_check
          %p196 = pneg %p118
        $region30: #{siglip_loss.1} parent=23 // pred_check_branch
          %198 = sbr.rel (%p196) target = $region32
        $region31: #{siglip_loss.1} parent=23 // pred_region
          %s199 = sand.u32 %s108, 1
          %s200 = scalar_lea.sflag [#allocation7], %s199
          %s201 = sand.u32 %s108, 1
          %s202 = smul.addr %s201, 128
          %s203 = scalar_lea.vmem [#allocation6], %s202
          %s204 = smul.u32 16, %s26
          %s206 = ssub.s32 2048, 2048
          %207 = vsyncadd %s200, %s206
          %s208 = smul.addr %s204, 128
          %s209 = scalar_lea.hbm %s3, %s208
          %s210 = sshll.u32 %s203, 4
          %s211 = int_to_ptr.vmem [resolvable:$true] %s210
          %216 = dma.hbm_to_vmem [thread:$0]  %s209, 2048, %s211, %s200, 128, 128, 8
        $region32: #{siglip_loss.1} parent=23 // pred_fallthru
          _
      $region24: #{siglip_loss.1} parent=5 // pred_fallthru
        _
      %p217 = scmp.le.s32.totalorder 1, %s18
      %p218 = scmp.lt.s32.totalorder %s18, 10
      %p219 = pnand %p217, %p218
      %p220 = pneg %p219
      // Predicated region
      $region33: #{siglip_loss.1} parent=5 // pred_check
        _
      $region34: #{siglip_loss.1} parent=5 // pred_check_branch
        %222 = sbr.rel (%p219) target = $region36
      $region35: #{siglip_loss.1} parent=5 // pred_region
        %s223 = ssub.s32 %s18, 1
        %s224 = sand.u32 %s85, 1
        %s225 = scalar_lea.sflag [#allocation5], %s224
        %s226 = sand.u32 %s85, 1
        %s227 = smul.addr %s226, 128
        %s228 = scalar_lea.vmem [#allocation4], %s227
        // Predicated region
        $region37: #{siglip_loss.1} parent=35 // pred_check
          %p229 = pneg %p98
        $region38: #{siglip_loss.1} parent=35 // pred_check_branch
          %231 = sbr.rel (%p229) target = $region40
        $region39: #{siglip_loss.1} parent=35 // pred_region
          %232 = dma.done %s225, 2048
        $region40: #{siglip_loss.1} parent=35 // pred_fallthru
          _
        %s233 = sand.u32 %s111, 1
        %s234 = scalar_lea.sflag [#allocation7], %s233
        %s235 = sand.u32 %s111, 1
        %s236 = smul.addr %s235, 128
        %s237 = scalar_lea.vmem [#allocation6], %s236
        // Predicated region
        $region41: #{siglip_loss.1} parent=35 // pred_check
          %p238 = pneg %p124
        $region42: #{siglip_loss.1} parent=35 // pred_check_branch
          %240 = sbr.rel (%p238) target = $region44
        $region43: #{siglip_loss.1} parent=35 // pred_region
          %241 = dma.done %s234, 2048
        $region44: #{siglip_loss.1} parent=35 // pred_fallthru
          _
        %p242 = pneg %p51
        %p243 = pneg %p48
        %p244 = pneg %p72
        %p245 = pneg %p69
        %s246 = sand.u32 %s85, 1
        %s247 = scalar_lea.sflag [#allocation5], %s246
        %s248 = sand.u32 %s85, 1
        %s249 = smul.addr %s248, 128
        %s250 = scalar_lea.vmem [#allocation4], %s249
        %p251 = pneg %p98
        %p252 = pneg %p95
        %s253 = sand.u32 %s111, 1
        %s254 = scalar_lea.sflag [#allocation7], %s253
        %s255 = sand.u32 %s111, 1
        %s256 = smul.addr %s255, 128
        %s257 = scalar_lea.vmem [#allocation6], %s256
        %p258 = pneg %p124
        %p259 = pneg %p121
        %p260 = pneg %p150
        %p261 = pneg %p147
        %s262 = smul.u32 16, %s27
        %p263 = scmp.lt.s32.totalorder %s262, 47
        %s264 = scalar_select %p263, %s262, 47
        %s265 = smul.addr %s264, 8
        %s266 = scalar_lea.vmem %s4, %s265
        %s267 = smul.u32 16, %s27
        %s268 = smul.u32 16, %s28
        %s269 = smul.u32 16, %s27
        %p270 = scmp.lt.s32.totalorder %s269, 47
        %s271 = scalar_select %p270, %s269, 47
        %s272 = smul.addr %s271, 8
        %s273 = scalar_lea.vmem %s4, %s272
        %s274 = smul.u32 16, %s27
        %s275 = sld [smem:[#allocation2]]
        %s276 = sld [smem:[#allocation3]]
        %p277 = scmp.eq.s32.totalorder %s28, 0
        // Predicated region
        $region45: #{siglip_loss.1} parent=35 // pred_check
          %p278 = pneg %p277
        $region46: #{siglip_loss.1} parent=35 // pred_check_branch
          %280 = sbr.rel (%p278) target = $region48
        $region47: #{siglip_loss.1} parent=35 // pred_region
          %vm281 = vcmask 7168
          %282 = vst.msk [vmem:[%s273] sm:$0xff] %vm281, 0.0
          %283 = vst.msk [vmem:[%s273 + $0x8] sm:$0xff] %vm281, 0.0
          %284 = vst.msk [vmem:[%s273 + $0x10] sm:$0xff] %vm281, 0.0
          %285 = vst.msk [vmem:[%s273 + $0x18] sm:$0xff] %vm281, 0.0
          %286 = vst.msk [vmem:[%s273 + $0x20] sm:$0xff] %vm281, 0.0
          %287 = vst.msk [vmem:[%s273 + $0x28] sm:$0xff] %vm281, 0.0
          %288 = vst.msk [vmem:[%s273 + $0x30] sm:$0xff] %vm281, 0.0
          %289 = vst.msk [vmem:[%s273 + $0x38] sm:$0xff] %vm281, 0.0
          %290 = vst.msk [vmem:[%s273 + $0x40] sm:$0xff] %vm281, 0.0
          %291 = vst.msk [vmem:[%s273 + $0x48] sm:$0xff] %vm281, 0.0
          %292 = vst.msk [vmem:[%s273 + $0x50] sm:$0xff] %vm281, 0.0
          %293 = vst.msk [vmem:[%s273 + $0x58] sm:$0xff] %vm281, 0.0
          %294 = vst.msk [vmem:[%s273 + $0x60] sm:$0xff] %vm281, 0.0
          %295 = vst.msk [vmem:[%s273 + $0x68] sm:$0xff] %vm281, 0.0
          %296 = vst.msk [vmem:[%s273 + $0x70] sm:$0xff] %vm281, 0.0
          %297 = vst.msk [vmem:[%s273 + $0x78] sm:$0xff] %vm281, 0.0
        $region48: #{siglip_loss.1} parent=35 // pred_fallthru
          _
        %v298 = vld [vmem:[%s228] sm:$0xff]
        %v299 = vld [vmem:[%s228 + $0x8] sm:$0xff]
        %v300 = vld [vmem:[%s228 + $0x10] sm:$0xff]
        %v301 = vld [vmem:[%s228 + $0x18] sm:$0xff]
        %v302 = vld [vmem:[%s228 + $0x20] sm:$0xff]
        %v303 = vld [vmem:[%s228 + $0x28] sm:$0xff]
        %v304 = vld [vmem:[%s228 + $0x30] sm:$0xff]
        %v305 = vld [vmem:[%s228 + $0x38] sm:$0xff]
        %v306 = vld [vmem:[%s228 + $0x40] sm:$0xff]
        %v307 = vld [vmem:[%s228 + $0x48] sm:$0xff]
        %v308 = vld [vmem:[%s228 + $0x50] sm:$0xff]
        %v309 = vld [vmem:[%s228 + $0x58] sm:$0xff]
        %v310 = vld [vmem:[%s228 + $0x60] sm:$0xff]
        %v311 = vld [vmem:[%s228 + $0x68] sm:$0xff]
        %v312 = vld [vmem:[%s228 + $0x70] sm:$0xff]
        %v313 = vld [vmem:[%s228 + $0x78] sm:$0xff]
        %v314 = vld [vmem:[%s237] sm:$0xff]
        %v315 = vld [vmem:[%s237 + $0x8] sm:$0xff]
        %v316 = vld [vmem:[%s237 + $0x10] sm:$0xff]
        %v317 = vld [vmem:[%s237 + $0x18] sm:$0xff]
        %v318 = vld [vmem:[%s237 + $0x20] sm:$0xff]
        %v319 = vld [vmem:[%s237 + $0x28] sm:$0xff]
        %v320 = vld [vmem:[%s237 + $0x30] sm:$0xff]
        %v321 = vld [vmem:[%s237 + $0x38] sm:$0xff]
        %v322 = vld [vmem:[%s237 + $0x40] sm:$0xff]
        %v323 = vld [vmem:[%s237 + $0x48] sm:$0xff]
        %v324 = vld [vmem:[%s237 + $0x50] sm:$0xff]
        %v325 = vld [vmem:[%s237 + $0x58] sm:$0xff]
        %v326 = vld [vmem:[%s237 + $0x60] sm:$0xff]
        %v327 = vld [vmem:[%s237 + $0x68] sm:$0xff]
        %v328 = vld [vmem:[%s237 + $0x70] sm:$0xff]
        %v329 = vld [vmem:[%s237 + $0x78] sm:$0xff]
        %330 = vmatprep.subr.mxu0 0.0
        %331 = vmatpush1.xpose.msra.mxu0 %v314
        %332 = vmatprep.subr.mxu0 0.0
        %333 = vmatpush1.xpose.msra.mxu0 %v315
        %334 = vmatprep.subr.mxu0 0.0
        %335 = vmatpush1.xpose.msra.mxu0 %v316
        %336 = vmatprep.subr.mxu0 0.0
        %337 = vmatpush1.xpose.msra.mxu0 %v317
        %338 = vmatprep.subr.mxu0 0.0
        %339 = vmatpush1.xpose.msra.mxu0 %v318
        %340 = vmatprep.subr.mxu0 0.0
        %341 = vmatpush1.xpose.msra.mxu0 %v319
        %342 = vmatprep.subr.mxu0 0.0
        %343 = vmatpush1.xpose.msra.mxu0 %v320
        %344 = vmatprep.subr.mxu0 0.0
        %345 = vmatpush1.xpose.msra.mxu0 %v321
        %346 = vmatprep.subr.mxu0 0.0
        %347 = vmatpush1.xpose.msra.mxu0 %v322
        %348 = vmatprep.subr.mxu0 0.0
        %349 = vmatpush1.xpose.msra.mxu0 %v323
        %350 = vmatprep.subr.mxu0 0.0
        %351 = vmatpush1.xpose.msra.mxu0 %v324
        %352 = vmatprep.subr.mxu0 0.0
        %353 = vmatpush1.xpose.msra.mxu0 %v325
        %354 = vmatprep.subr.mxu0 0.0
        %355 = vmatpush1.xpose.msra.mxu0 %v326
        %356 = vmatprep.subr.mxu0 0.0
        %357 = vmatpush1.xpose.msra.mxu0 %v327
        %358 = vmatprep.subr.mxu0 0.0
        %359 = vmatpush1.xpose.msra.mxu0 %v328
        %360 = vmatprep.subr.mxu0 0.0
        %361 = vmatpush1.xpose.msra.mxu0 %v329
        %362 = vmatprep.subr.mxu0 0.0
        %363 = vmatpush1.xpose.msra.mxu0 0.0
        %364 = vmatprep.subr.mxu0 0.0
        %365 = vmatpush1.xpose.msra.mxu0 0.0
        %366 = vmatprep.subr.mxu0 0.0
        %367 = vmatpush1.xpose.msra.mxu0 0.0
        %368 = vmatprep.subr.mxu0 0.0
        %369 = vmatpush1.xpose.msra.mxu0 0.0
        %370 = vmatprep.subr.mxu0 0.0
        %371 = vmatpush1.xpose.msra.mxu0 0.0
        %372 = vmatprep.subr.mxu0 0.0
        %373 = vmatpush1.xpose.msra.mxu0 0.0
        %374 = vmatprep.subr.mxu0 0.0
        %375 = vmatpush1.xpose.msra.mxu0 0.0
        %376 = vmatprep.subr.mxu0 0.0
        %377 = vmatpush1.xpose.msra.mxu0 0.0
        %378 = vmatprep.subr.mxu0 0.0
        %379 = vmatpush1.xpose.msra.mxu0 0.0
        %380 = vmatprep.subr.mxu0 0.0
        %381 = vmatpush1.xpose.msra.mxu0 0.0
        %382 = vmatprep.subr.mxu0 0.0
        %383 = vmatpush1.xpose.msra.mxu0 0.0
        %384 = vmatprep.subr.mxu0 0.0
        %385 = vmatpush1.xpose.msra.mxu0 0.0
        %386 = vmatprep.subr.mxu0 0.0
        %387 = vmatpush1.xpose.msra.mxu0 0.0
        %388 = vmatprep.subr.mxu0 0.0
        %389 = vmatpush1.xpose.msra.mxu0 0.0
        %390 = vmatprep.subr.mxu0 0.0
        %391 = vmatpush1.xpose.msra.mxu0 0.0
        %392 = vmatprep.subr.mxu0 0.0
        %393 = vmatpush1.xpose.msra.mxu0 0.0
        %394 = vmatprep.mubr.f32.mxu0 0.0
        %395 = vmatmul.mubr.f32.gmra.mrb[0].mxu0 %v298
        %v396 = vpop.f32.mrb[0].mxu0
        %v397 = vadd.f32 0.0, %v396
        %v398 = vpop.f32.mrb[0].mxu0
        %399 = vmatprep.mubr.f32.mxu0 0.0
        %400 = vmatmul.mubr.f32.gmra.mrb[0].mxu0 %v299
        %v401 = vpop.f32.mrb[0].mxu0
        %v402 = vadd.f32 0.0, %v401
        %v403 = vpop.f32.mrb[0].mxu0
        %404 = vmatprep.mubr.f32.mxu0 0.0
        %405 = vmatmul.mubr.f32.gmra.mrb[0].mxu0 %v300
        %v406 = vpop.f32.mrb[0].mxu0
        %v407 = vadd.f32 0.0, %v406
        %v408 = vpop.f32.mrb[0].mxu0
        %409 = vmatprep.mubr.f32.mxu0 0.0
        %410 = vmatmul.mubr.f32.gmra.mrb[0].mxu0 %v301
        %v411 = vpop.f32.mrb[0].mxu0
        %v412 = vadd.f32 0.0, %v411
        %v413 = vpop.f32.mrb[0].mxu0
        %414 = vmatprep.mubr.f32.mxu0 0.0
        %415 = vmatmul.mubr.f32.gmra.mrb[0].mxu0 %v302
        %v416 = vpop.f32.mrb[0].mxu0
        %v417 = vadd.f32 0.0, %v416
        %v418 = vpop.f32.mrb[0].mxu0
        %419 = vmatprep.mubr.f32.mxu0 0.0
        %420 = vmatmul.mubr.f32.gmra.mrb[0].mxu0 %v303
        %v421 = vpop.f32.mrb[0].mxu0
        %v422 = vadd.f32 0.0, %v421
        %v423 = vpop.f32.mrb[0].mxu0
        %424 = vmatprep.mubr.f32.mxu0 0.0
        %425 = vmatmul.mubr.f32.gmra.mrb[0].mxu0 %v304
        %v426 = vpop.f32.mrb[0].mxu0
        %v427 = vadd.f32 0.0, %v426
        %v428 = vpop.f32.mrb[0].mxu0
        %429 = vmatprep.mubr.f32.mxu0 0.0
        %430 = vmatmul.mubr.f32.gmra.mrb[0].mxu0 %v305
        %v431 = vpop.f32.mrb[0].mxu0
        %v432 = vadd.f32 0.0, %v431
        %v433 = vpop.f32.mrb[0].mxu0
        %434 = vmatprep.mubr.f32.mxu0 0.0
        %435 = vmatmul.mubr.f32.gmra.mrb[0].mxu0 %v306
        %v436 = vpop.f32.mrb[0].mxu0
        %v437 = vadd.f32 0.0, %v436
        %v438 = vpop.f32.mrb[0].mxu0
        %439 = vmatprep.mubr.f32.mxu0 0.0
        %440 = vmatmul.mubr.f32.gmra.mrb[0].mxu0 %v307
        %v441 = vpop.f32.mrb[0].mxu0
        %v442 = vadd.f32 0.0, %v441
        %v443 = vpop.f32.mrb[0].mxu0
        %444 = vmatprep.mubr.f32.mxu0 0.0
        %445 = vmatmul.mubr.f32.gmra.mrb[0].mxu0 %v308
        %v446 = vpop.f32.mrb[0].mxu0
        %v447 = vadd.f32 0.0, %v446
        %v448 = vpop.f32.mrb[0].mxu0
        %449 = vmatprep.mubr.f32.mxu0 0.0
        %450 = vmatmul.mubr.f32.gmra.mrb[0].mxu0 %v309
        %v451 = vpop.f32.mrb[0].mxu0
        %v452 = vadd.f32 0.0, %v451
        %v453 = vpop.f32.mrb[0].mxu0
        %454 = vmatprep.mubr.f32.mxu0 0.0
        %455 = vmatmul.mubr.f32.gmra.mrb[0].mxu0 %v310
        %v456 = vpop.f32.mrb[0].mxu0
        %v457 = vadd.f32 0.0, %v456
        %v458 = vpop.f32.mrb[0].mxu0
        %459 = vmatprep.mubr.f32.mxu0 0.0
        %460 = vmatmul.mubr.f32.gmra.mrb[0].mxu0 %v311
        %v461 = vpop.f32.mrb[0].mxu0
        %v462 = vadd.f32 0.0, %v461
        %v463 = vpop.f32.mrb[0].mxu0
        %464 = vmatprep.mubr.f32.mxu0 0.0
        %465 = vmatmul.mubr.f32.gmra.mrb[0].mxu0 %v312
        %v466 = vpop.f32.mrb[0].mxu0
        %v467 = vadd.f32 0.0, %v466
        %v468 = vpop.f32.mrb[0].mxu0
        %469 = vmatprep.mubr.f32.mxu0 0.0
        %470 = vmatmul.mubr.f32.gmra.mrb[0].mxu0 %v313
        %v471 = vpop.f32.mrb[0].mxu0
        %v472 = vadd.f32 0.0, %v471
        %v473 = vpop.f32.mrb[0].mxu0
        %474 = vdwg.mxu0
        %v475 = vstv %s275
        %v476 = vmul.f32 %v397, %v475
        %v477 = vmul.f32 %v402, %v475
        %v478 = vmul.f32 %v407, %v475
        %v479 = vmul.f32 %v412, %v475
        %v480 = vmul.f32 %v417, %v475
        %v481 = vmul.f32 %v422, %v475
        %v482 = vmul.f32 %v427, %v475
        %v483 = vmul.f32 %v432, %v475
        %v484 = vmul.f32 %v437, %v475
        %v485 = vmul.f32 %v442, %v475
        %v486 = vmul.f32 %v447, %v475
        %v487 = vmul.f32 %v452, %v475
        %v488 = vmul.f32 %v457, %v475
        %v489 = vmul.f32 %v462, %v475
        %v490 = vmul.f32 %v467, %v475
        %v491 = vmul.f32 %v472, %v475
        %v492 = vstv %s276
        %v493 = vadd.f32 %v476, %v492
        %v494 = vadd.f32 %v477, %v492
        %v495 = vadd.f32 %v478, %v492
        %v496 = vadd.f32 %v479, %v492
        %v497 = vadd.f32 %v480, %v492
        %v498 = vadd.f32 %v481, %v492
        %v499 = vadd.f32 %v482, %v492
        %v500 = vadd.f32 %v483, %v492
        %v501 = vadd.f32 %v484, %v492
        %v502 = vadd.f32 %v485, %v492
        %v503 = vadd.f32 %v486, %v492
        %v504 = vadd.f32 %v487, %v492
        %v505 = vadd.f32 %v488, %v492
        %v506 = vadd.f32 %v489, %v492
        %v507 = vadd.f32 %v490, %v492
        %v508 = vadd.f32 %v491, %v492
        %v509 = vmax.f32 %v493, 0.0
        %v510 = vmax.f32 %v494, 0.0
        %v511 = vmax.f32 %v495, 0.0
        %v512 = vmax.f32 %v496, 0.0
        %v513 = vmax.f32 %v497, 0.0
        %v514 = vmax.f32 %v498, 0.0
        %v515 = vmax.f32 %v499, 0.0
        %v516 = vmax.f32 %v500, 0.0
        %v517 = vmax.f32 %v501, 0.0
        %v518 = vmax.f32 %v502, 0.0
        %v519 = vmax.f32 %v503, 0.0
        %v520 = vmax.f32 %v504, 0.0
        %v521 = vmax.f32 %v505, 0.0
        %v522 = vmax.f32 %v506, 0.0
        %v523 = vmax.f32 %v507, 0.0
        %v524 = vmax.f32 %v508, 0.0
        %v525 = vsub.f32 0.0, %v509
        %v526 = vsub.f32 0.0, %v510
        %v527 = vsub.f32 0.0, %v511
        %v528 = vsub.f32 0.0, %v512
        %v529 = vsub.f32 0.0, %v513
        %v530 = vsub.f32 0.0, %v514
        %v531 = vsub.f32 0.0, %v515
        %v532 = vsub.f32 0.0, %v516
        %v533 = vsub.f32 0.0, %v517
        %v534 = vsub.f32 0.0, %v518
        %v535 = vsub.f32 0.0, %v519
        %v536 = vsub.f32 0.0, %v520
        %v537 = vsub.f32 0.0, %v521
        %v538 = vsub.f32 0.0, %v522
        %v539 = vsub.f32 0.0, %v523
        %v540 = vsub.f32 0.0, %v524
        %v541 = vand.u32 2147483647, %v493
        %v542 = vand.u32 2147483647, %v494
        %v543 = vand.u32 2147483647, %v495
        %v544 = vand.u32 2147483647, %v496
        %v545 = vand.u32 2147483647, %v497
        %v546 = vand.u32 2147483647, %v498
        %v547 = vand.u32 2147483647, %v499
        %v548 = vand.u32 2147483647, %v500
        %v549 = vand.u32 2147483647, %v501
        %v550 = vand.u32 2147483647, %v502
        %v551 = vand.u32 2147483647, %v503
        %v552 = vand.u32 2147483647, %v504
        %v553 = vand.u32 2147483647, %v505
        %v554 = vand.u32 2147483647, %v506
        %v555 = vand.u32 2147483647, %v507
        %v556 = vand.u32 2147483647, %v508
        %v557 = vsub.f32 0.0, %v541
        %v558 = vsub.f32 0.0, %v542
        %v559 = vsub.f32 0.0, %v543
        %v560 = vsub.f32 0.0, %v544
        %v561 = vsub.f32 0.0, %v545
        %v562 = vsub.f32 0.0, %v546
        %v563 = vsub.f32 0.0, %v547
        %v564 = vsub.f32 0.0, %v548
        %v565 = vsub.f32 0.0, %v549
        %v566 = vsub.f32 0.0, %v550
        %v567 = vsub.f32 0.0, %v551
        %v568 = vsub.f32 0.0, %v552
        %v569 = vsub.f32 0.0, %v553
        %v570 = vsub.f32 0.0, %v554
        %v571 = vsub.f32 0.0, %v555
        %v572 = vsub.f32 0.0, %v556
        %v573 = vmul.f32 %v557, 1.442695
        %v574 = vpow.pop %v573
        %v575 = vmul.f32 %v558, 1.442695
        %v576 = vpow.pop %v575
        %v577 = vmul.f32 %v559, 1.442695
        %v578 = vpow.pop %v577
        %v579 = vmul.f32 %v560, 1.442695
        %v580 = vpow.pop %v579
        %v581 = vmul.f32 %v561, 1.442695
        %v582 = vpow.pop %v581
        %v583 = vmul.f32 %v562, 1.442695
        %v584 = vpow.pop %v583
        %v585 = vmul.f32 %v563, 1.442695
        %v586 = vpow.pop %v585
        %v587 = vmul.f32 %v564, 1.442695
        %v588 = vpow.pop %v587
        %v589 = vmul.f32 %v565, 1.442695
        %v590 = vpow.pop %v589
        %v591 = vmul.f32 %v566, 1.442695
        %v592 = vpow.pop %v591
        %v593 = vmul.f32 %v567, 1.442695
        %v594 = vpow.pop %v593
        %v595 = vmul.f32 %v568, 1.442695
        %v596 = vpow.pop %v595
        %v597 = vmul.f32 %v569, 1.442695
        %v598 = vpow.pop %v597
        %v599 = vmul.f32 %v570, 1.442695
        %v600 = vpow.pop %v599
        %v601 = vmul.f32 %v571, 1.442695
        %v602 = vpow.pop %v601
        %v603 = vmul.f32 %v572, 1.442695
        %v604 = vpow.pop %v603
        %v605 = vadd.f32 %v574, 1.0
        %v606 = vlog2.pop %v605
        %v607 = vmul.f32 %v606, 0.6931472
        %v608 = vmul.f32 -0.5, %v574
        %v609 = vadd.f32 %v608, 1.0
        %v610 = vmul.f32 %v609, %v574
        %v611 = vand.u32 2147483647, %v574
        %vm612 = vcmp.lt.f32.partialorder %v611, 0.0004427343
        %v613 = vsel %vm612, %v610, %v607
        %v614 = vadd.f32 %v576, 1.0
        %v615 = vlog2.pop %v614
        %v616 = vmul.f32 %v615, 0.6931472
        %v617 = vmul.f32 -0.5, %v576
        %v618 = vadd.f32 %v617, 1.0
        %v619 = vmul.f32 %v618, %v576
        %v620 = vand.u32 2147483647, %v576
        %vm621 = vcmp.lt.f32.partialorder %v620, 0.0004427343
        %v622 = vsel %vm621, %v619, %v616
        %v623 = vadd.f32 %v578, 1.0
        %v624 = vlog2.pop %v623
        %v625 = vmul.f32 %v624, 0.6931472
        %v626 = vmul.f32 -0.5, %v578
        %v627 = vadd.f32 %v626, 1.0
        %v628 = vmul.f32 %v627, %v578
        %v629 = vand.u32 2147483647, %v578
        %vm630 = vcmp.lt.f32.partialorder %v629, 0.0004427343
        %v631 = vsel %vm630, %v628, %v625
        %v632 = vadd.f32 %v580, 1.0
        %v633 = vlog2.pop %v632
        %v634 = vmul.f32 %v633, 0.6931472
        %v635 = vmul.f32 -0.5, %v580
        %v636 = vadd.f32 %v635, 1.0
        %v637 = vmul.f32 %v636, %v580
        %v638 = vand.u32 2147483647, %v580
        %vm639 = vcmp.lt.f32.partialorder %v638, 0.0004427343
        %v640 = vsel %vm639, %v637, %v634
        %v641 = vadd.f32 %v582, 1.0
        %v642 = vlog2.pop %v641
        %v643 = vmul.f32 %v642, 0.6931472
        %v644 = vmul.f32 -0.5, %v582
        %v645 = vadd.f32 %v644, 1.0
        %v646 = vmul.f32 %v645, %v582
        %v647 = vand.u32 2147483647, %v582
        %vm648 = vcmp.lt.f32.partialorder %v647, 0.0004427343
        %v649 = vsel %vm648, %v646, %v643
        %v650 = vadd.f32 %v584, 1.0
        %v651 = vlog2.pop %v650
        %v652 = vmul.f32 %v651, 0.6931472
        %v653 = vmul.f32 -0.5, %v584
        %v654 = vadd.f32 %v653, 1.0
        %v655 = vmul.f32 %v654, %v584
        %v656 = vand.u32 2147483647, %v584
        %vm657 = vcmp.lt.f32.partialorder %v656, 0.0004427343
        %v658 = vsel %vm657, %v655, %v652
        %v659 = vadd.f32 %v586, 1.0
        %v660 = vlog2.pop %v659
        %v661 = vmul.f32 %v660, 0.6931472
        %v662 = vmul.f32 -0.5, %v586
        %v663 = vadd.f32 %v662, 1.0
        %v664 = vmul.f32 %v663, %v586
        %v665 = vand.u32 2147483647, %v586
        %vm666 = vcmp.lt.f32.partialorder %v665, 0.0004427343
        %v667 = vsel %vm666, %v664, %v661
        %v668 = vadd.f32 %v588, 1.0
        %v669 = vlog2.pop %v668
        %v670 = vmul.f32 %v669, 0.6931472
        %v671 = vmul.f32 -0.5, %v588
        %v672 = vadd.f32 %v671, 1.0
        %v673 = vmul.f32 %v672, %v588
        %v674 = vand.u32 2147483647, %v588
        %vm675 = vcmp.lt.f32.partialorder %v674, 0.0004427343
        %v676 = vsel %vm675, %v673, %v670
        %v677 = vadd.f32 %v590, 1.0
        %v678 = vlog2.pop %v677
        %v679 = vmul.f32 %v678, 0.6931472
        %v680 = vmul.f32 -0.5, %v590
        %v681 = vadd.f32 %v680, 1.0
        %v682 = vmul.f32 %v681, %v590
        %v683 = vand.u32 2147483647, %v590
        %vm684 = vcmp.lt.f32.partialorder %v683, 0.0004427343
        %v685 = vsel %vm684, %v682, %v679
        %v686 = vadd.f32 %v592, 1.0
        %v687 = vlog2.pop %v686
        %v688 = vmul.f32 %v687, 0.6931472
        %v689 = vmul.f32 -0.5, %v592
        %v690 = vadd.f32 %v689, 1.0
        %v691 = vmul.f32 %v690, %v592
        %v692 = vand.u32 2147483647, %v592
        %vm693 = vcmp.lt.f32.partialorder %v692, 0.0004427343
        %v694 = vsel %vm693, %v691, %v688
        %v695 = vadd.f32 %v594, 1.0
        %v696 = vlog2.pop %v695
        %v697 = vmul.f32 %v696, 0.6931472
        %v698 = vmul.f32 -0.5, %v594
        %v699 = vadd.f32 %v698, 1.0
        %v700 = vmul.f32 %v699, %v594
        %v701 = vand.u32 2147483647, %v594
        %vm702 = vcmp.lt.f32.partialorder %v701, 0.0004427343
        %v703 = vsel %vm702, %v700, %v697
        %v704 = vadd.f32 %v596, 1.0
        %v705 = vlog2.pop %v704
        %v706 = vmul.f32 %v705, 0.6931472
        %v707 = vmul.f32 -0.5, %v596
        %v708 = vadd.f32 %v707, 1.0
        %v709 = vmul.f32 %v708, %v596
        %v710 = vand.u32 2147483647, %v596
        %vm711 = vcmp.lt.f32.partialorder %v710, 0.0004427343
        %v712 = vsel %vm711, %v709, %v706
        %v713 = vadd.f32 %v598, 1.0
        %v714 = vlog2.pop %v713
        %v715 = vmul.f32 %v714, 0.6931472
        %v716 = vmul.f32 -0.5, %v598
        %v717 = vadd.f32 %v716, 1.0
        %v718 = vmul.f32 %v717, %v598
        %v719 = vand.u32 2147483647, %v598
        %vm720 = vcmp.lt.f32.partialorder %v719, 0.0004427343
        %v721 = vsel %vm720, %v718, %v715
        %v722 = vadd.f32 %v600, 1.0
        %v723 = vlog2.pop %v722
        %v724 = vmul.f32 %v723, 0.6931472
        %v725 = vmul.f32 -0.5, %v600
        %v726 = vadd.f32 %v725, 1.0
        %v727 = vmul.f32 %v726, %v600
        %v728 = vand.u32 2147483647, %v600
        %vm729 = vcmp.lt.f32.partialorder %v728, 0.0004427343
        %v730 = vsel %vm729, %v727, %v724
        %v731 = vadd.f32 %v602, 1.0
        %v732 = vlog2.pop %v731
        %v733 = vmul.f32 %v732, 0.6931472
        %v734 = vmul.f32 -0.5, %v602
        %v735 = vadd.f32 %v734, 1.0
        %v736 = vmul.f32 %v735, %v602
        %v737 = vand.u32 2147483647, %v602
        %vm738 = vcmp.lt.f32.partialorder %v737, 0.0004427343
        %v739 = vsel %vm738, %v736, %v733
        %v740 = vadd.f32 %v604, 1.0
        %v741 = vlog2.pop %v740
        %v742 = vmul.f32 %v741, 0.6931472
        %v743 = vmul.f32 -0.5, %v604
        %v744 = vadd.f32 %v743, 1.0
        %v745 = vmul.f32 %v744, %v604
        %v746 = vand.u32 2147483647, %v604
        %vm747 = vcmp.lt.f32.partialorder %v746, 0.0004427343
        %v748 = vsel %vm747, %v745, %v742
        %v749 = vsub.f32 %v525, %v613
        %v750 = vsub.f32 %v526, %v622
        %v751 = vsub.f32 %v527, %v631
        %v752 = vsub.f32 %v528, %v640
        %v753 = vsub.f32 %v529, %v649
        %v754 = vsub.f32 %v530, %v658
        %v755 = vsub.f32 %v531, %v667
        %v756 = vsub.f32 %v532, %v676
        %v757 = vsub.f32 %v533, %v685
        %v758 = vsub.f32 %v534, %v694
        %v759 = vsub.f32 %v535, %v703
        %v760 = vsub.f32 %v536, %v712
        %v761 = vsub.f32 %v537, %v721
        %v762 = vsub.f32 %v538, %v730
        %v763 = vsub.f32 %v539, %v739
        %v764 = vsub.f32 %v540, %v748
        %765 = vadd.xlane.f32.xlu0 %v749
        %v766 = vpop.xlane.xlu0 %765
        %767 = vadd.xlane.f32.xlu0 %v750
        %v768 = vpop.xlane.xlu0 %767
        %769 = vadd.xlane.f32.xlu0 %v751
        %v770 = vpop.xlane.xlu0 %769
        %771 = vadd.xlane.f32.xlu0 %v752
        %v772 = vpop.xlane.xlu0 %771
        %773 = vadd.xlane.f32.xlu0 %v753
        %v774 = vpop.xlane.xlu0 %773
        %775 = vadd.xlane.f32.xlu0 %v754
        %v776 = vpop.xlane.xlu0 %775
        %777 = vadd.xlane.f32.xlu0 %v755
        %v778 = vpop.xlane.xlu0 %777
        %779 = vadd.xlane.f32.xlu0 %v756
        %v780 = vpop.xlane.xlu0 %779
        %781 = vadd.xlane.f32.xlu0 %v757
        %v782 = vpop.xlane.xlu0 %781
        %783 = vadd.xlane.f32.xlu0 %v758
        %v784 = vpop.xlane.xlu0 %783
        %785 = vadd.xlane.f32.xlu0 %v759
        %v786 = vpop.xlane.xlu0 %785
        %787 = vadd.xlane.f32.xlu0 %v760
        %v788 = vpop.xlane.xlu0 %787
        %789 = vadd.xlane.f32.xlu0 %v761
        %v790 = vpop.xlane.xlu0 %789
        %791 = vadd.xlane.f32.xlu0 %v762
        %v792 = vpop.xlane.xlu0 %791
        %793 = vadd.xlane.f32.xlu0 %v763
        %v794 = vpop.xlane.xlu0 %793
        %795 = vadd.xlane.f32.xlu0 %v764
        %v796 = vpop.xlane.xlu0 %795
        %v797 = vadd.f32 %v766, 0.0
        %v798 = vadd.f32 %v768, 0.0
        %v799 = vadd.f32 %v770, 0.0
        %v800 = vadd.f32 %v772, 0.0
        %v801 = vadd.f32 %v774, 0.0
        %v802 = vadd.f32 %v776, 0.0
        %v803 = vadd.f32 %v778, 0.0
        %v804 = vadd.f32 %v780, 0.0
        %v805 = vadd.f32 %v782, 0.0
        %v806 = vadd.f32 %v784, 0.0
        %v807 = vadd.f32 %v786, 0.0
        %v808 = vadd.f32 %v788, 0.0
        %v809 = vadd.f32 %v790, 0.0
        %v810 = vadd.f32 %v792, 0.0
        %v811 = vadd.f32 %v794, 0.0
        %v812 = vadd.f32 %v796, 0.0
        %v813 = vld [vmem:[%s273] sm:$0xff]
        %v814 = vld [vmem:[%s273 + $0x8] sm:$0xff]
        %v815 = vld [vmem:[%s273 + $0x10] sm:$0xff]
        %v816 = vld [vmem:[%s273 + $0x18] sm:$0xff]
        %v817 = vld [vmem:[%s273 + $0x20] sm:$0xff]
        %v818 = vld [vmem:[%s273 + $0x28] sm:$0xff]
        %v819 = vld [vmem:[%s273 + $0x30] sm:$0xff]
        %v820 = vld [vmem:[%s273 + $0x38] sm:$0xff]
        %v821 = vld [vmem:[%s273 + $0x40] sm:$0xff]
        %v822 = vld [vmem:[%s273 + $0x48] sm:$0xff]
        %v823 = vld [vmem:[%s273 + $0x50] sm:$0xff]
        %v824 = vld [vmem:[%s273 + $0x58] sm:$0xff]
        %v825 = vld [vmem:[%s273 + $0x60] sm:$0xff]
        %v826 = vld [vmem:[%s273 + $0x68] sm:$0xff]
        %v827 = vld [vmem:[%s273 + $0x70] sm:$0xff]
        %v828 = vld [vmem:[%s273 + $0x78] sm:$0xff]
        %v829 = vadd.f32 %v813, %v797
        %v830 = vadd.f32 %v814, %v798
        %v831 = vadd.f32 %v815, %v799
        %v832 = vadd.f32 %v816, %v800
        %v833 = vadd.f32 %v817, %v801
        %v834 = vadd.f32 %v818, %v802
        %v835 = vadd.f32 %v819, %v803
        %v836 = vadd.f32 %v820, %v804
        %v837 = vadd.f32 %v821, %v805
        %v838 = vadd.f32 %v822, %v806
        %v839 = vadd.f32 %v823, %v807
        %v840 = vadd.f32 %v824, %v808
        %v841 = vadd.f32 %v825, %v809
        %v842 = vadd.f32 %v826, %v810
        %v843 = vadd.f32 %v827, %v811
        %v844 = vadd.f32 %v828, %v812
        %vm845 = vcmask 7168
        %846 = vst.msk [vmem:[%s273] sm:$0xff] %vm845, %v829
        %847 = vst.msk [vmem:[%s273 + $0x8] sm:$0xff] %vm845, %v830
        %848 = vst.msk [vmem:[%s273 + $0x10] sm:$0xff] %vm845, %v831
        %849 = vst.msk [vmem:[%s273 + $0x18] sm:$0xff] %vm845, %v832
        %850 = vst.msk [vmem:[%s273 + $0x20] sm:$0xff] %vm845, %v833
        %851 = vst.msk [vmem:[%s273 + $0x28] sm:$0xff] %vm845, %v834
        %852 = vst.msk [vmem:[%s273 + $0x30] sm:$0xff] %vm845, %v835
        %853 = vst.msk [vmem:[%s273 + $0x38] sm:$0xff] %vm845, %v836
        %854 = vst.msk [vmem:[%s273 + $0x40] sm:$0xff] %vm845, %v837
        %855 = vst.msk [vmem:[%s273 + $0x48] sm:$0xff] %vm845, %v838
        %856 = vst.msk [vmem:[%s273 + $0x50] sm:$0xff] %vm845, %v839
        %857 = vst.msk [vmem:[%s273 + $0x58] sm:$0xff] %vm845, %v840
        %858 = vst.msk [vmem:[%s273 + $0x60] sm:$0xff] %vm845, %v841
        %859 = vst.msk [vmem:[%s273 + $0x68] sm:$0xff] %vm845, %v842
        %860 = vst.msk [vmem:[%s273 + $0x70] sm:$0xff] %vm845, %v843
        %861 = vst.msk [vmem:[%s273 + $0x78] sm:$0xff] %vm845, %v844
        %p862 = scmp.eq.s32.totalorder %s27, %s28
        // Predicated region
        $region49: #{siglip_loss.1} parent=35 // pred_check
          %p863 = pneg %p862
        $region50: #{siglip_loss.1} parent=35 // pred_check_branch
          %865 = sbr.rel (%p863) target = $region52
        $region51: #{siglip_loss.1} parent=35 // pred_region
          %v866 = vld [vmem:[%s237] sm:$0xff]
          %v867 = vld [vmem:[%s237 + $0x8] sm:$0xff]
          %v868 = vld [vmem:[%s237 + $0x10] sm:$0xff]
          %v869 = vld [vmem:[%s237 + $0x18] sm:$0xff]
          %v870 = vld [vmem:[%s237 + $0x20] sm:$0xff]
          %v871 = vld [vmem:[%s237 + $0x28] sm:$0xff]
          %v872 = vld [vmem:[%s237 + $0x30] sm:$0xff]
          %v873 = vld [vmem:[%s237 + $0x38] sm:$0xff]
          %v874 = vld [vmem:[%s237 + $0x40] sm:$0xff]
          %v875 = vld [vmem:[%s237 + $0x48] sm:$0xff]
          %v876 = vld [vmem:[%s237 + $0x50] sm:$0xff]
          %v877 = vld [vmem:[%s237 + $0x58] sm:$0xff]
          %v878 = vld [vmem:[%s237 + $0x60] sm:$0xff]
          %v879 = vld [vmem:[%s237 + $0x68] sm:$0xff]
          %v880 = vld [vmem:[%s237 + $0x70] sm:$0xff]
          %v881 = vld [vmem:[%s237 + $0x78] sm:$0xff]
          %v882 = vmul.f32 %v298, %v866
          %v883 = vmul.f32 %v299, %v867
          %v884 = vmul.f32 %v300, %v868
          %v885 = vmul.f32 %v301, %v869
          %v886 = vmul.f32 %v302, %v870
          %v887 = vmul.f32 %v303, %v871
          %v888 = vmul.f32 %v304, %v872
          %v889 = vmul.f32 %v305, %v873
          %v890 = vmul.f32 %v306, %v874
          %v891 = vmul.f32 %v307, %v875
          %v892 = vmul.f32 %v308, %v876
          %v893 = vmul.f32 %v309, %v877
          %v894 = vmul.f32 %v310, %v878
          %v895 = vmul.f32 %v311, %v879
          %v896 = vmul.f32 %v312, %v880
          %v897 = vmul.f32 %v313, %v881
          %898 = vadd.xlane.f32.xlu0 %v882
          %v899 = vpop.xlane.xlu0 %898
          %900 = vadd.xlane.f32.xlu0 %v883
          %v901 = vpop.xlane.xlu0 %900
          %902 = vadd.xlane.f32.xlu0 %v884
          %v903 = vpop.xlane.xlu0 %902
          %904 = vadd.xlane.f32.xlu0 %v885
          %v905 = vpop.xlane.xlu0 %904
          %906 = vadd.xlane.f32.xlu0 %v886
          %v907 = vpop.xlane.xlu0 %906
          %908 = vadd.xlane.f32.xlu0 %v887
          %v909 = vpop.xlane.xlu0 %908
          %910 = vadd.xlane.f32.xlu0 %v888
          %v911 = vpop.xlane.xlu0 %910
          %912 = vadd.xlane.f32.xlu0 %v889
          %v913 = vpop.xlane.xlu0 %912
          %914 = vadd.xlane.f32.xlu0 %v890
          %v915 = vpop.xlane.xlu0 %914
          %916 = vadd.xlane.f32.xlu0 %v891
          %v917 = vpop.xlane.xlu0 %916
          %918 = vadd.xlane.f32.xlu0 %v892
          %v919 = vpop.xlane.xlu0 %918
          %920 = vadd.xlane.f32.xlu0 %v893
          %v921 = vpop.xlane.xlu0 %920
          %922 = vadd.xlane.f32.xlu0 %v894
          %v923 = vpop.xlane.xlu0 %922
          %924 = vadd.xlane.f32.xlu0 %v895
          %v925 = vpop.xlane.xlu0 %924
          %926 = vadd.xlane.f32.xlu0 %v896
          %v927 = vpop.xlane.xlu0 %926
          %928 = vadd.xlane.f32.xlu0 %v897
          %v929 = vpop.xlane.xlu0 %928
          %v930 = vmul.f32 %v899, %v475
          %v931 = vmul.f32 %v901, %v475
          %v932 = vmul.f32 %v903, %v475
          %v933 = vmul.f32 %v905, %v475
          %v934 = vmul.f32 %v907, %v475
          %v935 = vmul.f32 %v909, %v475
          %v936 = vmul.f32 %v911, %v475
          %v937 = vmul.f32 %v913, %v475
          %v938 = vmul.f32 %v915, %v475
          %v939 = vmul.f32 %v917, %v475
          %v940 = vmul.f32 %v919, %v475
          %v941 = vmul.f32 %v921, %v475
          %v942 = vmul.f32 %v923, %v475
          %v943 = vmul.f32 %v925, %v475
          %v944 = vmul.f32 %v927, %v475
          %v945 = vmul.f32 %v929, %v475
          %v946 = vadd.f32 %v930, %v492
          %v947 = vadd.f32 %v931, %v492
          %v948 = vadd.f32 %v932, %v492
          %v949 = vadd.f32 %v933, %v492
          %v950 = vadd.f32 %v934, %v492
          %v951 = vadd.f32 %v935, %v492
          %v952 = vadd.f32 %v936, %v492
          %v953 = vadd.f32 %v937, %v492
          %v954 = vadd.f32 %v938, %v492
          %v955 = vadd.f32 %v939, %v492
          %v956 = vadd.f32 %v940, %v492
          %v957 = vadd.f32 %v941, %v492
          %v958 = vadd.f32 %v942, %v492
          %v959 = vadd.f32 %v943, %v492
          %v960 = vadd.f32 %v944, %v492
          %v961 = vadd.f32 %v945, %v492
          %v962 = vld [vmem:[%s273] sm:$0xff]
          %v963 = vld [vmem:[%s273 + $0x8] sm:$0xff]
          %v964 = vld [vmem:[%s273 + $0x10] sm:$0xff]
          %v965 = vld [vmem:[%s273 + $0x18] sm:$0xff]
          %v966 = vld [vmem:[%s273 + $0x20] sm:$0xff]
          %v967 = vld [vmem:[%s273 + $0x28] sm:$0xff]
          %v968 = vld [vmem:[%s273 + $0x30] sm:$0xff]
          %v969 = vld [vmem:[%s273 + $0x38] sm:$0xff]
          %v970 = vld [vmem:[%s273 + $0x40] sm:$0xff]
          %v971 = vld [vmem:[%s273 + $0x48] sm:$0xff]
          %v972 = vld [vmem:[%s273 + $0x50] sm:$0xff]
          %v973 = vld [vmem:[%s273 + $0x58] sm:$0xff]
          %v974 = vld [vmem:[%s273 + $0x60] sm:$0xff]
          %v975 = vld [vmem:[%s273 + $0x68] sm:$0xff]
          %v976 = vld [vmem:[%s273 + $0x70] sm:$0xff]
          %v977 = vld [vmem:[%s273 + $0x78] sm:$0xff]
          %v978 = vadd.f32 %v962, %v946
          %v979 = vadd.f32 %v963, %v947
          %v980 = vadd.f32 %v964, %v948
          %v981 = vadd.f32 %v965, %v949
          %v982 = vadd.f32 %v966, %v950
          %v983 = vadd.f32 %v967, %v951
          %v984 = vadd.f32 %v968, %v952
          %v985 = vadd.f32 %v969, %v953
          %v986 = vadd.f32 %v970, %v954
          %v987 = vadd.f32 %v971, %v955
          %v988 = vadd.f32 %v972, %v956
          %v989 = vadd.f32 %v973, %v957
          %v990 = vadd.f32 %v974, %v958
          %v991 = vadd.f32 %v975, %v959
          %v992 = vadd.f32 %v976, %v960
          %v993 = vadd.f32 %v977, %v961
          %994 = vst.msk [vmem:[%s273] sm:$0xff] %vm845, %v978
          %995 = vst.msk [vmem:[%s273 + $0x8] sm:$0xff] %vm845, %v979
          %996 = vst.msk [vmem:[%s273 + $0x10] sm:$0xff] %vm845, %v980
          %997 = vst.msk [vmem:[%s273 + $0x18] sm:$0xff] %vm845, %v981
          %998 = vst.msk [vmem:[%s273 + $0x20] sm:$0xff] %vm845, %v982
          %999 = vst.msk [vmem:[%s273 + $0x28] sm:$0xff] %vm845, %v983
          %1000 = vst.msk [vmem:[%s273 + $0x30] sm:$0xff] %vm845, %v984
          %1001 = vst.msk [vmem:[%s273 + $0x38] sm:$0xff] %vm845, %v985
          %1002 = vst.msk [vmem:[%s273 + $0x40] sm:$0xff] %vm845, %v986
          %1003 = vst.msk [vmem:[%s273 + $0x48] sm:$0xff] %vm845, %v987
          %1004 = vst.msk [vmem:[%s273 + $0x50] sm:$0xff] %vm845, %v988
          %1005 = vst.msk [vmem:[%s273 + $0x58] sm:$0xff] %vm845, %v989
          %1006 = vst.msk [vmem:[%s273 + $0x60] sm:$0xff] %vm845, %v990
          %1007 = vst.msk [vmem:[%s273 + $0x68] sm:$0xff] %vm845, %v991
          %1008 = vst.msk [vmem:[%s273 + $0x70] sm:$0xff] %vm845, %v992
          %1009 = vst.msk [vmem:[%s273 + $0x78] sm:$0xff] %vm845, %v993
        $region52: #{siglip_loss.1} parent=35 // pred_fallthru
          _
        %s1010 = smul.u32 16, %s27
        %p1011 = scmp.lt.s32.totalorder %s1010, 47
        %s1012 = scalar_select %p1011, %s1010, 47
        %s1013 = smul.addr %s1012, 8
        %s1014 = scalar_lea.vmem %s4, %s1013
        // Predicated region
        $region53: #{siglip_loss.1} parent=35 // pred_check
          %p1015 = pneg %p147
        $region54: #{siglip_loss.1} parent=35 // pred_check_branch
          %1017 = sbr.rel (%p1015) target = $region56
        $region55: #{siglip_loss.1} parent=35 // pred_region
          %s1018 = smul.u32 16, %s27
        $region56: #{siglip_loss.1} parent=35 // pred_fallthru
          _
      $region36: #{siglip_loss.1} parent=5 // pred_fallthru
        _
      %p1019 = scmp.le.s32.totalorder 2, %s18
      // Predicated region
      $region57: #{siglip_loss.1} parent=5 // pred_check
        %p1020 = pneg %p1019
      $region58: #{siglip_loss.1} parent=5 // pred_check_branch
        %1022 = sbr.rel (%p1020) target = $region60
      $region59: #{siglip_loss.1} parent=5 // pred_region
        %s1023 = ssub.s32 %s18, 2
        // Predicated region
        $region61: #{siglip_loss.1} parent=59 // pred_check
          %p1024 = pneg %p153
        $region62: #{siglip_loss.1} parent=59 // pred_check_branch
          %1026 = sbr.rel (%p1024) target = $region64
        $region63: #{siglip_loss.1} parent=59 // pred_region
          %s1027 = smul.u32 16, %s29
          %p1028 = scmp.lt.s32.totalorder %s1027, 47
          %s1029 = scalar_select %p1028, %s1027, 47
          %s1030 = smul.addr %s1029, 8
          %s1031 = scalar_lea.vmem %s4, %s1030
        $region64: #{siglip_loss.1} parent=59 // pred_fallthru
          _
      $region60: #{siglip_loss.1} parent=5 // pred_fallthru
        _
    $region6: #{siglip_loss.1} parent=1 // loop_footer
      %s22 = sadd.s32 1, %s18
    $region7: #{siglip_loss.1} parent=1 // loop_footer_branch
      %17 = sbr.rel target = $region3
    $region8: #{siglip_loss.1} parent=1 // loop_exit
      _
    %1032 = vsyncpa [#allocation5], 1
    %s1033 = scalar_lea.sflag [#allocation5], 1
    %1034 = vsyncpa %s1033, 1
    %1035 = vsyncpa [#allocation7], 1
    %s1036 = scalar_lea.sflag [#allocation7], 1
    %1037 = vsyncpa %s1036, 1

</llo_original>
